<compile_context>
chip_gen: v5e
topology: v5e:2x2
jax: 0.10.0
libtpu: 0.0.40
codegen_flags: <defaults>
</compile_context>

<pallas_src>
import jax
import jax.numpy as jnp
from jax.experimental import pallas as pl
from jax.experimental.pallas import tpu as pltpu


def _conv1x1_kernel(w_ref, x_ref, o_ref):
    # (Cout, Cin) @ (Cin, TN) -> (Cout, TN) on the MXU, fp32 accumulation.
    o_ref[...] = jnp.dot(
        w_ref[...], x_ref[...], preferred_element_type=jnp.float32
    ).astype(o_ref.dtype)


def conv2d_1x1(x_nchw, weight_oi11):
    """PyTorch-equivalent Conv2d(Cin, Cout, kernel_size=1, stride=1, bias=False).

    x_nchw:      (N, Cin, H, W)  float32
    weight_oi11: (Cout, Cin, 1, 1) float32
    returns:     (N, Cout, H, W) float32
    """
    N, Cin, H, W = x_nchw.shape
    Cout = weight_oi11.shape[0]
    HW = H * W

    # Free reshapes (no transposes): NCHW -> (N, Cin, H*W); OIHW -> (Cout, Cin).
    x_mat = x_nchw.reshape(N, Cin, HW)
    w_mat = weight_oi11.reshape(Cout, Cin)

    # Spatial (lane) tile.  For small feature maps use one full-extent block:
    # full-array last-dim blocks are exempt from the (8,128) divisibility rule,
    # so no padding and no post-kernel crop are needed.  Only tile when the
    # per-step tile would be large (TN_CAP=2048 -> 2.5 MB input tile at
    # Cin=320 f32; well under VMEM with double buffering on v5e/v6e/v7x).
    TN_CAP = 2048
    TN = HW if HW <= TN_CAP else TN_CAP
    num_j = pl.cdiv(HW, TN)

    cost = pl.CostEstimate(
        flops=2 * N * HW * Cin * Cout,
        transcendentals=0,
        bytes_accessed=4 * (N * Cin * HW + Cout * Cin + N * Cout * HW),
    )

    vmem = pltpu.MemorySpace.VMEM
    if N == 1:
        # Drop the degenerate batch grid axis.
        grid = (num_j,)
        w_spec = pl.BlockSpec((Cout, Cin), lambda j: (0, 0), memory_space=vmem)
        x_spec = pl.BlockSpec((None, Cin, TN), lambda j: (0, 0, j), memory_space=vmem)
        o_spec = pl.BlockSpec((None, Cout, TN), lambda j: (0, 0, j), memory_space=vmem)
        semantics = ("arbitrary",) if num_j == 1 else ("parallel",)
    else:
        grid = (N, num_j)
        w_spec = pl.BlockSpec((Cout, Cin), lambda n, j: (0, 0), memory_space=vmem)
        x_spec = pl.BlockSpec((None, Cin, TN), lambda n, j: (n, 0, j), memory_space=vmem)
        o_spec = pl.BlockSpec((None, Cout, TN), lambda n, j: (n, 0, j), memory_space=vmem)
        semantics = ("parallel", "parallel")

    out_mat = pl.pallas_call(
        _conv1x1_kernel,
        out_shape=jax.ShapeDtypeStruct((N, Cout, HW), x_nchw.dtype),
        grid=grid,
        in_specs=[w_spec, x_spec],
        out_specs=o_spec,
        compiler_params=pltpu.CompilerParams(dimension_semantics=semantics),
        cost_estimate=cost,
    )(w_mat, x_mat)

    return out_mat.reshape(N, Cout, H, W)


if __name__ == "__main__":
    key = jax.random.PRNGKey(0)
    kx, kw = jax.random.split(key)

    # Shapes from the PyTorch module: x157 ~ (1, 320, 14, 14), Conv2d(320, 128, 1x1)
    N, Cin, H, W, Cout = 1, 320, 14, 14, 128
    x = jax.random.normal(kx, (N, Cin, H, W), dtype=jnp.float32)
    # Deterministic Kaiming-uniform-like init (synthetic, not a checkpoint load)
    fan_in = Cin * 1 * 1
    bound = (1.0 / fan_in) ** 0.5
    weight = jax.random.uniform(
        kw, (Cout, Cin, 1, 1), dtype=jnp.float32, minval=-bound, maxval=bound
    )

    out = jax.jit(conv2d_1x1)(x, weight)
    out = jax.block_until_ready(out)

    # Correctness check against a plain-JAX reference of the same conv.
    ref = jnp.einsum("nchw,oc->nohw", x, weight.reshape(Cout, Cin))
    assert out.shape == (N, Cout, H, W)
    assert jnp.allclose(out, ref, atol=1e-4, rtol=1e-4)

    print("KERNEL_OK")
</pallas_src>

<mosaic_0001>
module attributes {stable_mosaic.version = 11 : i64} {
  func.func @_conv1x1_kernel(%arg0: i32, %arg1: memref<128x320xf32, #tpu.memory_space<vmem>>, %arg2: memref<1x320x196xf32, #tpu.memory_space<vmem>>, %arg3: memref<1x128x196xf32, #tpu.memory_space<vmem>>) attributes {dimension_semantics = [#tpu.dimension_semantics<arbitrary>], iteration_bounds = array<i64: 1>, scalar_prefetch = 0 : i64, scratch_operands = 0 : i64, tpu.core_type = #tpu.core_type<tc>, window_params = [{pipeline_mode = #tpu.pipeline_mode<synchronous>, transform_indices = @transform_0, window_bounds = array<i64: 128, 320>}, {transform_indices = @transform_1, window_bounds = array<i64: 1, 320, 196>}, {transform_indices = @transform_2, window_bounds = array<i64: 1, 128, 196>}]} {
    %c0 = arith.constant 0 : index
    %c0_0 = arith.constant 0 : index
    %0 = vector.load %arg1[%c0, %c0_0] : memref<128x320xf32, #tpu.memory_space<vmem>>, vector<128x320xf32>
    %c0_1 = arith.constant 0 : index
    %c0_2 = arith.constant 0 : index
    %c0_3 = arith.constant 0 : index
    %1 = vector.load %arg2[%c0_1, %c0_2, %c0_3] : memref<1x320x196xf32, #tpu.memory_space<vmem>>, vector<1x320x196xf32>
    %2 = vector.shape_cast %1 : vector<1x320x196xf32> to vector<320x196xf32>
    %cst = arith.constant dense<0.000000e+00> : vector<128x196xf32>
    %3 = tpu.matmul %0, %2, %cst {dimension_numbers = #tpu.dot_dimension_numbers<[1], [0], [0], [1], [0, 0, 1, 1], [], []>} : vector<128x320xf32>, vector<320x196xf32>, vector<128x196xf32> -> vector<128x196xf32>
    %c0_4 = arith.constant 0 : index
    %c0_5 = arith.constant 0 : index
    %c0_6 = arith.constant 0 : index
    %4 = vector.load %arg3[%c0_4, %c0_5, %c0_6] : memref<1x128x196xf32, #tpu.memory_space<vmem>>, vector<1x128x196xf32>
    %5 = vector.shape_cast %4 : vector<1x128x196xf32> to vector<128x196xf32>
    %6 = vector.shape_cast %3 : vector<128x196xf32> to vector<1x128x196xf32>
    tpu.vector_store %arg3[%c0_4, %c0_5, %c0_6], %6 {strides = array<i32>} : memref<1x128x196xf32, #tpu.memory_space<vmem>>, vector<1x128x196xf32>,
    return
  }
  func.func @transform_0(%arg0: i32) -> (i32, i32) {
    %c0_i32 = arith.constant 0 : i32
    %c0_i32_0 = arith.constant 0 : i32
    %c0_i32_1 = arith.constant 0 : i32
    return %c0_i32, %c0_i32_0 : i32, i32
  }
  func.func @transform_1(%arg0: i32) -> (i32, i32, i32) {
    %c0_i32 = arith.constant 0 : i32
    %c0_i32_0 = arith.constant 0 : i32
    %c0_i32_1 = arith.constant 0 : i32
    return %c0_i32, %c0_i32_0, %arg0 : i32, i32, i32
  }
  func.func @transform_2(%arg0: i32) -> (i32, i32, i32) {
    %c0_i32 = arith.constant 0 : i32
    %c0_i32_0 = arith.constant 0 : i32
    %c0_i32_1 = arith.constant 0 : i32
    return %c0_i32, %c0_i32_0, %arg0 : i32, i32, i32
  }
}

</mosaic_0001>

<llo_original>
// kernel: conv2d_1x1.1
$region0: #{conv2d_1x1.1}
  #allocation0 [shape = 'u32[]', space=smem, size = 0x4, offset = 0x4, fixed_abs, tag = 'smem constant byte address 0x4 - core index']
  #allocation1 [shape = 'u32[72,128]{1,0:T(1,128)}', space=vmem, size = 0x9000, scoped, tag = 'internal scratch']
  %s0 = inlined_call_operand.vmem [shape: f32[128,320], index: 0, kind: input, shape index: {}]
  %s1 = inlined_call_operand.vmem [shape: f32[1,320,196], index: 1, kind: input, shape index: {}]
  %s2 = inlined_call_operand.vmem [shape: f32[1,128,196], index: 2, kind: output, shape index: {}]
  %s3 = sld [smem:[#allocation0]]
  $region18: #{conv2d_1x1.1} parent=0
    _
  %s5 = ssub.s32 1, %s3
  %s6 = scalar_select 0, %s5, %s3
  // Predicated region
  $region2: #{conv2d_1x1.1} parent=0 // pred_check
    _
  $region3: #{conv2d_1x1.1} parent=0 // pred_check_branch
    %8 = sbr.rel (0) target = $region5
  $region4: #{conv2d_1x1.1} parent=0 // pred_region
    _
  $region5: #{conv2d_1x1.1} parent=0 // pred_fallthru
    _
  // Predicated region
  $region6: #{conv2d_1x1.1} parent=0 // pred_check
    _
  $region7: #{conv2d_1x1.1} parent=0 // pred_check_branch
    %10 = sbr.rel (0) target = $region9
  $region8: #{conv2d_1x1.1} parent=0 // pred_region
    _
  $region9: #{conv2d_1x1.1} parent=0 // pred_fallthru
    _
  %v11 = vld [vmem:[%s0] sm:$0xff]
  %v12 = vld [vmem:[%s0 + $0x8] sm:$0xff]
  %v13 = vld [vmem:[%s0 + $0x10] sm:$0xff]
  %v14 = vld [vmem:[%s0 + $0x18] sm:$0xff]
  %v15 = vld [vmem:[%s0 + $0x20] sm:$0xff]
  %v16 = vld [vmem:[%s0 + $0x28] sm:$0xff]
  %v17 = vld [vmem:[%s0 + $0x30] sm:$0xff]
  %v18 = vld [vmem:[%s0 + $0x38] sm:$0xff]
  %v19 = vld [vmem:[%s0 + $0x40] sm:$0xff]
  %v20 = vld [vmem:[%s0 + $0x48] sm:$0xff]
  %v21 = vld [vmem:[%s0 + $0x50] sm:$0xff]
  %v22 = vld [vmem:[%s0 + $0x58] sm:$0xff]
  %v23 = vld [vmem:[%s0 + $0x60] sm:$0xff]
  %v24 = vld [vmem:[%s0 + $0x68] sm:$0xff]
  %v25 = vld [vmem:[%s0 + $0x70] sm:$0xff]
  %v26 = vld [vmem:[%s0 + $0x78] sm:$0xff]
  %v27 = vld [vmem:[%s0 + $0x80] sm:$0xff]
  %v28 = vld [vmem:[%s0 + $0x88] sm:$0xff]
  %v29 = vld [vmem:[%s0 + $0x90] sm:$0xff]
  %v30 = vld [vmem:[%s0 + $0x98] sm:$0xff]
  %v31 = vld [vmem:[%s0 + $0xa0] sm:$0xff]
  %v32 = vld [vmem:[%s0 + $0xa8] sm:$0xff]
  %v33 = vld [vmem:[%s0 + $0xb0] sm:$0xff]
  %v34 = vld [vmem:[%s0 + $0xb8] sm:$0xff]
  %v35 = vld [vmem:[%s0 + $0xc0] sm:$0xff]
  %v36 = vld [vmem:[%s0 + $0xc8] sm:$0xff]
  %v37 = vld [vmem:[%s0 + $0xd0] sm:$0xff]
  %v38 = vld [vmem:[%s0 + $0xd8] sm:$0xff]
  %v39 = vld [vmem:[%s0 + $0xe0] sm:$0xff]
  %v40 = vld [vmem:[%s0 + $0xe8] sm:$0xff]
  %v41 = vld [vmem:[%s0 + $0xf0] sm:$0xff]
  %v42 = vld [vmem:[%s0 + $0xf8] sm:$0xff]
  %v43 = vld [vmem:[%s0 + $0x100] sm:$0xff]
  %v44 = vld [vmem:[%s0 + $0x108] sm:$0xff]
  %v45 = vld [vmem:[%s0 + $0x110] sm:$0xff]
  %v46 = vld [vmem:[%s0 + $0x118] sm:$0xff]
  %v47 = vld [vmem:[%s0 + $0x120] sm:$0xff]
  %v48 = vld [vmem:[%s0 + $0x128] sm:$0xff]
  %v49 = vld [vmem:[%s0 + $0x130] sm:$0xff]
  %v50 = vld [vmem:[%s0 + $0x138] sm:$0xff]
  %v51 = vld [vmem:[%s0 + $0x140] sm:$0xff]
  %v52 = vld [vmem:[%s0 + $0x148] sm:$0xff]
  %v53 = vld [vmem:[%s0 + $0x150] sm:$0xff]
  %v54 = vld [vmem:[%s0 + $0x158] sm:$0xff]
  %v55 = vld [vmem:[%s0 + $0x160] sm:$0xff]
  %v56 = vld [vmem:[%s0 + $0x168] sm:$0xff]
  %v57 = vld [vmem:[%s0 + $0x170] sm:$0xff]
  %v58 = vld [vmem:[%s0 + $0x178] sm:$0xff]
  %v59 = vld [vmem:[%s1] sm:$0xff]
  %v60 = vld [vmem:[%s1 + $0x8] sm:$0xff]
  %v61 = vld [vmem:[%s1 + $0x10] sm:$0xff]
  %v62 = vld [vmem:[%s1 + $0x18] sm:$0xff]
  %v63 = vld [vmem:[%s1 + $0x20] sm:$0xff]
  %v64 = vld [vmem:[%s1 + $0x28] sm:$0xff]
  %v65 = vld [vmem:[%s1 + $0x30] sm:$0xff]
  %v66 = vld [vmem:[%s1 + $0x38] sm:$0xff]
  %v67 = vld [vmem:[%s1 + $0x40] sm:$0xff]
  %v68 = vld [vmem:[%s1 + $0x48] sm:$0xff]
  %v69 = vld [vmem:[%s1 + $0x50] sm:$0xff]
  %v70 = vld [vmem:[%s1 + $0x58] sm:$0xff]
  %v71 = vld [vmem:[%s1 + $0x60] sm:$0xff]
  %v72 = vld [vmem:[%s1 + $0x68] sm:$0xff]
  %v73 = vld [vmem:[%s1 + $0x70] sm:$0xff]
  %v74 = vld [vmem:[%s1 + $0x78] sm:$0xff]
  %v75 = vld [vmem:[%s1 + $0x80] sm:$0xff]
  %v76 = vld [vmem:[%s1 + $0x88] sm:$0xff]
  %v77 = vld [vmem:[%s1 + $0x90] sm:$0xff]
  %v78 = vld [vmem:[%s1 + $0x98] sm:$0xff]
  %v79 = vld [vmem:[%s1 + $0xa0] sm:$0xff]
  %v80 = vld [vmem:[%s1 + $0xa8] sm:$0xff]
  %v81 = vld [vmem:[%s1 + $0xb0] sm:$0xff]
  %v82 = vld [vmem:[%s1 + $0xb8] sm:$0xff]
  %v83 = vld [vmem:[%s1 + $0xc0] sm:$0xff]
  %v84 = vld [vmem:[%s1 + $0xc8] sm:$0xff]
  %v85 = vld [vmem:[%s1 + $0xd0] sm:$0xff]
  %v86 = vld [vmem:[%s1 + $0xd8] sm:$0xff]
  %v87 = vld [vmem:[%s1 + $0xe0] sm:$0xff]
  %v88 = vld [vmem:[%s1 + $0xe8] sm:$0xff]
  %v89 = vld [vmem:[%s1 + $0xf0] sm:$0xff]
  %v90 = vld [vmem:[%s1 + $0xf8] sm:$0xff]
  %v91 = vld [vmem:[%s1 + $0x100] sm:$0xff]
  %v92 = vld [vmem:[%s1 + $0x108] sm:$0xff]
  %v93 = vld [vmem:[%s1 + $0x110] sm:$0xff]
  %v94 = vld [vmem:[%s1 + $0x118] sm:$0xff]
  %v95 = vld [vmem:[%s1 + $0x120] sm:$0xff]
  %v96 = vld [vmem:[%s1 + $0x128] sm:$0xff]
  %v97 = vld [vmem:[%s1 + $0x130] sm:$0xff]
  %v98 = vld [vmem:[%s1 + $0x138] sm:$0xff]
  %v99 = vld [vmem:[%s1 + $0x140] sm:$0xff]
  %v100 = vld [vmem:[%s1 + $0x148] sm:$0xff]
  %v101 = vld [vmem:[%s1 + $0x150] sm:$0xff]
  %v102 = vld [vmem:[%s1 + $0x158] sm:$0xff]
  %v103 = vld [vmem:[%s1 + $0x160] sm:$0xff]
  %v104 = vld [vmem:[%s1 + $0x168] sm:$0xff]
  %v105 = vld [vmem:[%s1 + $0x170] sm:$0xff]
  %v106 = vld [vmem:[%s1 + $0x178] sm:$0xff]
  %v107 = vld [vmem:[%s1 + $0x180] sm:$0xff]
  %v108 = vld [vmem:[%s1 + $0x188] sm:$0xff]
  %v109 = vld [vmem:[%s1 + $0x190] sm:$0xff]
  %v110 = vld [vmem:[%s1 + $0x198] sm:$0xff]
  %v111 = vld [vmem:[%s1 + $0x1a0] sm:$0xff]
  %v112 = vld [vmem:[%s1 + $0x1a8] sm:$0xff]
  %v113 = vld [vmem:[%s1 + $0x1b0] sm:$0xff]
  %v114 = vld [vmem:[%s1 + $0x1b8] sm:$0xff]
  %v115 = vld [vmem:[%s1 + $0x1c0] sm:$0xff]
  %v116 = vld [vmem:[%s1 + $0x1c8] sm:$0xff]
  %v117 = vld [vmem:[%s1 + $0x1d0] sm:$0xff]
  %v118 = vld [vmem:[%s1 + $0x1d8] sm:$0xff]
  %v119 = vld [vmem:[%s1 + $0x1e0] sm:$0xff]
  %v120 = vld [vmem:[%s1 + $0x1e8] sm:$0xff]
  %v121 = vld [vmem:[%s1 + $0x1f0] sm:$0xff]
  %v122 = vld [vmem:[%s1 + $0x1f8] sm:$0xff]
  %v123 = vld [vmem:[%s1 + $0x200] sm:$0xff]
  %v124 = vld [vmem:[%s1 + $0x208] sm:$0xff]
  %v125 = vld [vmem:[%s1 + $0x210] sm:$0xff]
  %v126 = vld [vmem:[%s1 + $0x218] sm:$0xff]
  %v127 = vld [vmem:[%s1 + $0x220] sm:$0xff]
  %v128 = vld [vmem:[%s1 + $0x228] sm:$0xff]
  %v129 = vld [vmem:[%s1 + $0x230] sm:$0xff]
  %v130 = vld [vmem:[%s1 + $0x238] sm:$0xff]
  %v131 = vld [vmem:[%s1 + $0x240] sm:$0xff]
  %v132 = vld [vmem:[%s1 + $0x248] sm:$0xff]
  %v133 = vld [vmem:[%s1 + $0x250] sm:$0xff]
  %v134 = vld [vmem:[%s1 + $0x258] sm:$0xff]
  %v135 = vld [vmem:[%s1 + $0x260] sm:$0xff]
  %v136 = vld [vmem:[%s1 + $0x268] sm:$0xff]
  %v137 = vld [vmem:[%s1 + $0x270] sm:$0xff]
  %v138 = vld [vmem:[%s1 + $0x278] sm:$0xff]
  %vm139 = vcmask 523264
  %v141 = vsel %vm139, %v13, 0
  %v144 = vsel %vm139, %v16, 0
  %v147 = vsel %vm139, %v19, 0
  %v150 = vsel %vm139, %v22, 0
  %v153 = vsel %vm139, %v25, 0
  %v156 = vsel %vm139, %v28, 0
  %v159 = vsel %vm139, %v31, 0
  %v162 = vsel %vm139, %v34, 0
  %v165 = vsel %vm139, %v37, 0
  %v168 = vsel %vm139, %v40, 0
  %v171 = vsel %vm139, %v43, 0
  %v174 = vsel %vm139, %v46, 0
  %v177 = vsel %vm139, %v49, 0
  %v180 = vsel %vm139, %v52, 0
  %v183 = vsel %vm139, %v55, 0
  %v186 = vsel %vm139, %v58, 0
  %188 = vmatpush.msra.mxu0 %v89
  %189 = vmatpush.msra.mxu0 %v87
  %190 = vmatpush.msra.mxu0 %v85
  %191 = vmatpush.msra.mxu0 %v83
  %192 = vmatpush.msra.mxu0 %v81
  %193 = vmatpush.msra.mxu0 %v79
  %194 = vmatpush.msra.mxu0 %v77
  %195 = vmatpush.msra.mxu0 %v75
  %196 = vmatpush.msra.mxu0 %v73
  %197 = vmatpush.msra.mxu0 %v71
  %198 = vmatpush.msra.mxu0 %v69
  %199 = vmatpush.msra.mxu0 %v67
  %200 = vmatpush.msra.mxu0 %v65
  %201 = vmatpush.msra.mxu0 %v63
  %202 = vmatpush.msra.mxu0 %v61
  %203 = vmatpush.msra.mxu0 %v59
  %204 = vmatmul.f32.gmra.mxu0 %v11
  %v205 = vpop.f32.mrf.mxu0
  %v206 = vadd.f32 0.0, %v205
  %207 = vmatmul.f32.gmra.mxu0 %v14
  %v208 = vpop.f32.mrf.mxu0
  %v209 = vadd.f32 0.0, %v208
  %210 = vmatmul.f32.gmra.mxu0 %v17
  %v211 = vpop.f32.mrf.mxu0
  %v212 = vadd.f32 0.0, %v211
  %213 = vmatmul.f32.gmra.mxu0 %v20
  %v214 = vpop.f32.mrf.mxu0
  %v215 = vadd.f32 0.0, %v214
  %216 = vmatmul.f32.gmra.mxu0 %v23
  %v217 = vpop.f32.mrf.mxu0
  %v218 = vadd.f32 0.0, %v217
  %219 = vmatmul.f32.gmra.mxu0 %v26
  %v220 = vpop.f32.mrf.mxu0
  %v221 = vadd.f32 0.0, %v220
  %222 = vmatmul.f32.gmra.mxu0 %v29
  %v223 = vpop.f32.mrf.mxu0
  %v224 = vadd.f32 0.0, %v223
  %225 = vmatmul.f32.gmra.mxu0 %v32
  %v226 = vpop.f32.mrf.mxu0
  %v227 = vadd.f32 0.0, %v226
  %228 = vmatmul.f32.gmra.mxu0 %v35
  %v229 = vpop.f32.mrf.mxu0
  %v230 = vadd.f32 0.0, %v229
  %231 = vmatmul.f32.gmra.mxu0 %v38
  %v232 = vpop.f32.mrf.mxu0
  %v233 = vadd.f32 0.0, %v232
  %234 = vmatmul.f32.gmra.mxu0 %v41
  %v235 = vpop.f32.mrf.mxu0
  %v236 = vadd.f32 0.0, %v235
  %237 = vmatmul.f32.gmra.mxu0 %v44
  %v238 = vpop.f32.mrf.mxu0
  %v239 = vadd.f32 0.0, %v238
  %240 = vmatmul.f32.gmra.mxu0 %v47
  %v241 = vpop.f32.mrf.mxu0
  %v242 = vadd.f32 0.0, %v241
  %243 = vmatmul.f32.gmra.mxu0 %v50
  %v244 = vpop.f32.mrf.mxu0
  %v245 = vadd.f32 0.0, %v244
  %246 = vmatmul.f32.gmra.mxu0 %v53
  %v247 = vpop.f32.mrf.mxu0
  %v248 = vadd.f32 0.0, %v247
  %249 = vmatmul.f32.gmra.mxu0 %v56
  %v250 = vpop.f32.mrf.mxu0
  %v251 = vadd.f32 0.0, %v250
  %252 = vdwg.mxu0
  %253 = vmatpush.msra.mxu0 %v121
  %254 = vmatpush.msra.mxu0 %v119
  %255 = vmatpush.msra.mxu0 %v117
  %256 = vmatpush.msra.mxu0 %v115
  %257 = vmatpush.msra.mxu0 %v113
  %258 = vmatpush.msra.mxu0 %v111
  %259 = vmatpush.msra.mxu0 %v109
  %260 = vmatpush.msra.mxu0 %v107
  %261 = vmatpush.msra.mxu0 %v105
  %262 = vmatpush.msra.mxu0 %v103
  %263 = vmatpush.msra.mxu0 %v101
  %264 = vmatpush.msra.mxu0 %v99
  %265 = vmatpush.msra.mxu0 %v97
  %266 = vmatpush.msra.mxu0 %v95
  %267 = vmatpush.msra.mxu0 %v93
  %268 = vmatpush.msra.mxu0 %v91
  %269 = vmatmul.f32.gmra.mxu0 %v12
  %v270 = vpop.f32.mrf.mxu0
  %v271 = vadd.f32 %v206, %v270
  %272 = vmatmul.f32.gmra.mxu0 %v15
  %v273 = vpop.f32.mrf.mxu0
  %v274 = vadd.f32 %v209, %v273
  %275 = vmatmul.f32.gmra.mxu0 %v18
  %v276 = vpop.f32.mrf.mxu0
  %v277 = vadd.f32 %v212, %v276
  %278 = vmatmul.f32.gmra.mxu0 %v21
  %v279 = vpop.f32.mrf.mxu0
  %v280 = vadd.f32 %v215, %v279
  %281 = vmatmul.f32.gmra.mxu0 %v24
  %v282 = vpop.f32.mrf.mxu0
  %v283 = vadd.f32 %v218, %v282
  %284 = vmatmul.f32.gmra.mxu0 %v27
  %v285 = vpop.f32.mrf.mxu0
  %v286 = vadd.f32 %v221, %v285
  %287 = vmatmul.f32.gmra.mxu0 %v30
  %v288 = vpop.f32.mrf.mxu0
  %v289 = vadd.f32 %v224, %v288
  %290 = vmatmul.f32.gmra.mxu0 %v33
  %v291 = vpop.f32.mrf.mxu0
  %v292 = vadd.f32 %v227, %v291
  %293 = vmatmul.f32.gmra.mxu0 %v36
  %v294 = vpop.f32.mrf.mxu0
  %v295 = vadd.f32 %v230, %v294
  %296 = vmatmul.f32.gmra.mxu0 %v39
  %v297 = vpop.f32.mrf.mxu0
  %v298 = vadd.f32 %v233, %v297
  %299 = vmatmul.f32.gmra.mxu0 %v42
  %v300 = vpop.f32.mrf.mxu0
  %v301 = vadd.f32 %v236, %v300
  %302 = vmatmul.f32.gmra.mxu0 %v45
  %v303 = vpop.f32.mrf.mxu0
  %v304 = vadd.f32 %v239, %v303
  %305 = vmatmul.f32.gmra.mxu0 %v48
  %v306 = vpop.f32.mrf.mxu0
  %v307 = vadd.f32 %v242, %v306
  %308 = vmatmul.f32.gmra.mxu0 %v51
  %v309 = vpop.f32.mrf.mxu0
  %v310 = vadd.f32 %v245, %v309
  %311 = vmatmul.f32.gmra.mxu0 %v54
  %v312 = vpop.f32.mrf.mxu0
  %v313 = vadd.f32 %v248, %v312
  %314 = vmatmul.f32.gmra.mxu0 %v57
  %v315 = vpop.f32.mrf.mxu0
  %v316 = vadd.f32 %v251, %v315
  %317 = vdwg.mxu0
  %318 = vmatpush.msra.mxu0 0.0
  %319 = vmatpush.msra.mxu0 0.0
  %320 = vmatpush.msra.mxu0 0.0
  %321 = vmatpush.msra.mxu0 0.0
  %322 = vmatpush.msra.mxu0 0.0
  %323 = vmatpush.msra.mxu0 0.0
  %324 = vmatpush.msra.mxu0 0.0
  %325 = vmatpush.msra.mxu0 0.0
  %326 = vmatpush.msra.mxu0 %v137
  %327 = vmatpush.msra.mxu0 %v135
  %328 = vmatpush.msra.mxu0 %v133
  %329 = vmatpush.msra.mxu0 %v131
  %330 = vmatpush.msra.mxu0 %v129
  %331 = vmatpush.msra.mxu0 %v127
  %332 = vmatpush.msra.mxu0 %v125
  %333 = vmatpush.msra.mxu0 %v123
  %334 = vmatmul.f32.gmra.mxu0 %v141
  %v335 = vpop.f32.mrf.mxu0
  %v336 = vadd.f32 %v271, %v335
  %337 = vmatmul.f32.gmra.mxu0 %v144
  %v338 = vpop.f32.mrf.mxu0
  %v339 = vadd.f32 %v274, %v338
  %340 = vmatmul.f32.gmra.mxu0 %v147
  %v341 = vpop.f32.mrf.mxu0
  %v342 = vadd.f32 %v277, %v341
  %343 = vmatmul.f32.gmra.mxu0 %v150
  %v344 = vpop.f32.mrf.mxu0
  %v345 = vadd.f32 %v280, %v344
  %346 = vmatmul.f32.gmra.mxu0 %v153
  %v347 = vpop.f32.mrf.mxu0
  %v348 = vadd.f32 %v283, %v347
  %349 = vmatmul.f32.gmra.mxu0 %v156
  %v350 = vpop.f32.mrf.mxu0
  %v351 = vadd.f32 %v286, %v350
  %352 = vmatmul.f32.gmra.mxu0 %v159
  %v353 = vpop.f32.mrf.mxu0
  %v354 = vadd.f32 %v289, %v353
  %355 = vmatmul.f32.gmra.mxu0 %v162
  %v356 = vpop.f32.mrf.mxu0
  %v357 = vadd.f32 %v292, %v356
  %358 = vmatmul.f32.gmra.mxu0 %v165
  %v359 = vpop.f32.mrf.mxu0
  %v360 = vadd.f32 %v295, %v359
  %361 = vmatmul.f32.gmra.mxu0 %v168
  %v362 = vpop.f32.mrf.mxu0
  %v363 = vadd.f32 %v298, %v362
  %364 = vmatmul.f32.gmra.mxu0 %v171
  %v365 = vpop.f32.mrf.mxu0
  %v366 = vadd.f32 %v301, %v365
  %367 = vmatmul.f32.gmra.mxu0 %v174
  %v368 = vpop.f32.mrf.mxu0
  %v369 = vadd.f32 %v304, %v368
  %370 = vmatmul.f32.gmra.mxu0 %v177
  %v371 = vpop.f32.mrf.mxu0
  %v372 = vadd.f32 %v307, %v371
  %373 = vmatmul.f32.gmra.mxu0 %v180
  %v374 = vpop.f32.mrf.mxu0
  %v375 = vadd.f32 %v310, %v374
  %376 = vmatmul.f32.gmra.mxu0 %v183
  %v377 = vpop.f32.mrf.mxu0
  %v378 = vadd.f32 %v313, %v377
  %379 = vmatmul.f32.gmra.mxu0 %v186
  %v380 = vpop.f32.mrf.mxu0
  %v381 = vadd.f32 %v316, %v380
  %382 = vdwg.mxu0
  %383 = vmatpush.msra.mxu0 %v90
  %384 = vmatpush.msra.mxu0 %v88
  %385 = vmatpush.msra.mxu0 %v86
  %386 = vmatpush.msra.mxu0 %v84
  %387 = vmatpush.msra.mxu0 %v82
  %388 = vmatpush.msra.mxu0 %v80
  %389 = vmatpush.msra.mxu0 %v78
  %390 = vmatpush.msra.mxu0 %v76
  %391 = vmatpush.msra.mxu0 %v74
  %392 = vmatpush.msra.mxu0 %v72
  %393 = vmatpush.msra.mxu0 %v70
  %394 = vmatpush.msra.mxu0 %v68
  %395 = vmatpush.msra.mxu0 %v66
  %396 = vmatpush.msra.mxu0 %v64
  %397 = vmatpush.msra.mxu0 %v62
  %398 = vmatpush.msra.mxu0 %v60
  %399 = vmatmul.f32.gmra.mxu0 %v11
  %v400 = vpop.f32.mrf.mxu0
  %v401 = vadd.f32 0.0, %v400
  %402 = vmatmul.f32.gmra.mxu0 %v14
  %v403 = vpop.f32.mrf.mxu0
  %v404 = vadd.f32 0.0, %v403
  %405 = vmatmul.f32.gmra.mxu0 %v17
  %v406 = vpop.f32.mrf.mxu0
  %v407 = vadd.f32 0.0, %v406
  %408 = vmatmul.f32.gmra.mxu0 %v20
  %v409 = vpop.f32.mrf.mxu0
  %v410 = vadd.f32 0.0, %v409
  %411 = vmatmul.f32.gmra.mxu0 %v23
  %v412 = vpop.f32.mrf.mxu0
  %v413 = vadd.f32 0.0, %v412
  %414 = vmatmul.f32.gmra.mxu0 %v26
  %v415 = vpop.f32.mrf.mxu0
  %v416 = vadd.f32 0.0, %v415
  %417 = vmatmul.f32.gmra.mxu0 %v29
  %v418 = vpop.f32.mrf.mxu0
  %v419 = vadd.f32 0.0, %v418
  %420 = vmatmul.f32.gmra.mxu0 %v32
  %v421 = vpop.f32.mrf.mxu0
  %v422 = vadd.f32 0.0, %v421
  %423 = vmatmul.f32.gmra.mxu0 %v35
  %v424 = vpop.f32.mrf.mxu0
  %v425 = vadd.f32 0.0, %v424
  %426 = vmatmul.f32.gmra.mxu0 %v38
  %v427 = vpop.f32.mrf.mxu0
  %v428 = vadd.f32 0.0, %v427
  %429 = vmatmul.f32.gmra.mxu0 %v41
  %v430 = vpop.f32.mrf.mxu0
  %v431 = vadd.f32 0.0, %v430
  %432 = vmatmul.f32.gmra.mxu0 %v44
  %v433 = vpop.f32.mrf.mxu0
  %v434 = vadd.f32 0.0, %v433
  %435 = vmatmul.f32.gmra.mxu0 %v47
  %v436 = vpop.f32.mrf.mxu0
  %v437 = vadd.f32 0.0, %v436
  %438 = vmatmul.f32.gmra.mxu0 %v50
  %v439 = vpop.f32.mrf.mxu0
  %v440 = vadd.f32 0.0, %v439
  %441 = vmatmul.f32.gmra.mxu0 %v53
  %v442 = vpop.f32.mrf.mxu0
  %v443 = vadd.f32 0.0, %v442
  %444 = vmatmul.f32.gmra.mxu0 %v56
  %v445 = vpop.f32.mrf.mxu0
  %v446 = vadd.f32 0.0, %v445
  %447 = vdwg.mxu0
  %448 = vmatpush.msra.mxu0 %v122
  %449 = vmatpush.msra.mxu0 %v120
  %450 = vmatpush.msra.mxu0 %v118
  %451 = vmatpush.msra.mxu0 %v116
  %452 = vmatpush.msra.mxu0 %v114
  %453 = vmatpush.msra.mxu0 %v112
  %454 = vmatpush.msra.mxu0 %v110
  %455 = vmatpush.msra.mxu0 %v108
  %456 = vmatpush.msra.mxu0 %v106
  %457 = vmatpush.msra.mxu0 %v104
  %458 = vmatpush.msra.mxu0 %v102
  %459 = vmatpush.msra.mxu0 %v100
  %460 = vmatpush.msra.mxu0 %v98
  %461 = vmatpush.msra.mxu0 %v96
  %462 = vmatpush.msra.mxu0 %v94
  %463 = vmatpush.msra.mxu0 %v92
  %464 = vmatmul.f32.gmra.mxu0 %v12
  %v465 = vpop.f32.mrf.mxu0
  %v466 = vadd.f32 %v401, %v465
  %467 = vmatmul.f32.gmra.mxu0 %v15
  %v468 = vpop.f32.mrf.mxu0
  %v469 = vadd.f32 %v404, %v468
  %470 = vmatmul.f32.gmra.mxu0 %v18
  %v471 = vpop.f32.mrf.mxu0
  %v472 = vadd.f32 %v407, %v471
  %473 = vmatmul.f32.gmra.mxu0 %v21
  %v474 = vpop.f32.mrf.mxu0
  %v475 = vadd.f32 %v410, %v474
  %476 = vmatmul.f32.gmra.mxu0 %v24
  %v477 = vpop.f32.mrf.mxu0
  %v478 = vadd.f32 %v413, %v477
  %479 = vmatmul.f32.gmra.mxu0 %v27
  %v480 = vpop.f32.mrf.mxu0
  %v481 = vadd.f32 %v416, %v480
  %482 = vmatmul.f32.gmra.mxu0 %v30
  %v483 = vpop.f32.mrf.mxu0
  %v484 = vadd.f32 %v419, %v483
  %485 = vmatmul.f32.gmra.mxu0 %v33
  %v486 = vpop.f32.mrf.mxu0
  %v487 = vadd.f32 %v422, %v486
  %488 = vmatmul.f32.gmra.mxu0 %v36
  %v489 = vpop.f32.mrf.mxu0
  %v490 = vadd.f32 %v425, %v489
  %491 = vmatmul.f32.gmra.mxu0 %v39
  %v492 = vpop.f32.mrf.mxu0
  %v493 = vadd.f32 %v428, %v492
  %494 = vmatmul.f32.gmra.mxu0 %v42
  %v495 = vpop.f32.mrf.mxu0
  %v496 = vadd.f32 %v431, %v495
  %497 = vmatmul.f32.gmra.mxu0 %v45
  %v498 = vpop.f32.mrf.mxu0
  %v499 = vadd.f32 %v434, %v498
  %500 = vmatmul.f32.gmra.mxu0 %v48
  %v501 = vpop.f32.mrf.mxu0
  %v502 = vadd.f32 %v437, %v501
  %503 = vmatmul.f32.gmra.mxu0 %v51
  %v504 = vpop.f32.mrf.mxu0
  %v505 = vadd.f32 %v440, %v504
  %506 = vmatmul.f32.gmra.mxu0 %v54
  %v507 = vpop.f32.mrf.mxu0
  %v508 = vadd.f32 %v443, %v507
  %509 = vmatmul.f32.gmra.mxu0 %v57
  %v510 = vpop.f32.mrf.mxu0
  %v511 = vadd.f32 %v446, %v510
  %512 = vdwg.mxu0
  %513 = vmatpush.msra.mxu0 0.0
  %514 = vmatpush.msra.mxu0 0.0
  %515 = vmatpush.msra.mxu0 0.0
  %516 = vmatpush.msra.mxu0 0.0
  %517 = vmatpush.msra.mxu0 0.0
  %518 = vmatpush.msra.mxu0 0.0
  %519 = vmatpush.msra.mxu0 0.0
  %520 = vmatpush.msra.mxu0 0.0
  %521 = vmatpush.msra.mxu0 %v138
  %522 = vmatpush.msra.mxu0 %v136
  %523 = vmatpush.msra.mxu0 %v134
  %524 = vmatpush.msra.mxu0 %v132
  %525 = vmatpush.msra.mxu0 %v130
  %526 = vmatpush.msra.mxu0 %v128
  %527 = vmatpush.msra.mxu0 %v126
  %528 = vmatpush.msra.mxu0 %v124
  %529 = vmatmul.f32.gmra.mxu0 %v141
  %v530 = vpop.f32.mrf.mxu0
  %v531 = vadd.f32 %v466, %v530
  %532 = vmatmul.f32.gmra.mxu0 %v144
  %v533 = vpop.f32.mrf.mxu0
  %v534 = vadd.f32 %v469, %v533
  %535 = vmatmul.f32.gmra.mxu0 %v147
  %v536 = vpop.f32.mrf.mxu0
  %v537 = vadd.f32 %v472, %v536
  %538 = vmatmul.f32.gmra.mxu0 %v150
  %v539 = vpop.f32.mrf.mxu0
  %v540 = vadd.f32 %v475, %v539
  %541 = vmatmul.f32.gmra.mxu0 %v153
  %v542 = vpop.f32.mrf.mxu0
  %v543 = vadd.f32 %v478, %v542
  %544 = vmatmul.f32.gmra.mxu0 %v156
  %v545 = vpop.f32.mrf.mxu0
  %v546 = vadd.f32 %v481, %v545
  %547 = vmatmul.f32.gmra.mxu0 %v159
  %v548 = vpop.f32.mrf.mxu0
  %v549 = vadd.f32 %v484, %v548
  %550 = vmatmul.f32.gmra.mxu0 %v162
  %v551 = vpop.f32.mrf.mxu0
  %v552 = vadd.f32 %v487, %v551
  %553 = vmatmul.f32.gmra.mxu0 %v165
  %v554 = vpop.f32.mrf.mxu0
  %v555 = vadd.f32 %v490, %v554
  %556 = vmatmul.f32.gmra.mxu0 %v168
  %v557 = vpop.f32.mrf.mxu0
  %v558 = vadd.f32 %v493, %v557
  %559 = vmatmul.f32.gmra.mxu0 %v171
  %v560 = vpop.f32.mrf.mxu0
  %v561 = vadd.f32 %v496, %v560
  %562 = vmatmul.f32.gmra.mxu0 %v174
  %v563 = vpop.f32.mrf.mxu0
  %v564 = vadd.f32 %v499, %v563
  %565 = vmatmul.f32.gmra.mxu0 %v177
  %v566 = vpop.f32.mrf.mxu0
  %v567 = vadd.f32 %v502, %v566
  %568 = vmatmul.f32.gmra.mxu0 %v180
  %v569 = vpop.f32.mrf.mxu0
  %v570 = vadd.f32 %v505, %v569
  %571 = vmatmul.f32.gmra.mxu0 %v183
  %v572 = vpop.f32.mrf.mxu0
  %v573 = vadd.f32 %v508, %v572
  %574 = vmatmul.f32.gmra.mxu0 %v186
  %v575 = vpop.f32.mrf.mxu0
  %v576 = vadd.f32 %v511, %v575
  %577 = vdwg.mxu0
  %578 = vst [vmem:[%s2] sm:$0xff] %v336
  %vm579 = vcmask 556032
  %580 = vst.msk [vmem:[%s2 + $0x8] sm:$0xff] %vm579, %v531
  %581 = vst [vmem:[%s2 + $0x10] sm:$0xff] %v339
  %582 = vst.msk [vmem:[%s2 + $0x18] sm:$0xff] %vm579, %v534
  %583 = vst [vmem:[%s2 + $0x20] sm:$0xff] %v342
  %584 = vst.msk [vmem:[%s2 + $0x28] sm:$0xff] %vm579, %v537
  %585 = vst [vmem:[%s2 + $0x30] sm:$0xff] %v345
  %586 = vst.msk [vmem:[%s2 + $0x38] sm:$0xff] %vm579, %v540
  %587 = vst [vmem:[%s2 + $0x40] sm:$0xff] %v348
  %588 = vst.msk [vmem:[%s2 + $0x48] sm:$0xff] %vm579, %v543
  %589 = vst [vmem:[%s2 + $0x50] sm:$0xff] %v351
  %590 = vst.msk [vmem:[%s2 + $0x58] sm:$0xff] %vm579, %v546
  %591 = vst [vmem:[%s2 + $0x60] sm:$0xff] %v354
  %592 = vst.msk [vmem:[%s2 + $0x68] sm:$0xff] %vm579, %v549
  %593 = vst [vmem:[%s2 + $0x70] sm:$0xff] %v357
  %594 = vst.msk [vmem:[%s2 + $0x78] sm:$0xff] %vm579, %v552
  %595 = vst [vmem:[%s2 + $0x80] sm:$0xff] %v360
  %596 = vst.msk [vmem:[%s2 + $0x88] sm:$0xff] %vm579, %v555
  %597 = vst [vmem:[%s2 + $0x90] sm:$0xff] %v363
  %598 = vst.msk [vmem:[%s2 + $0x98] sm:$0xff] %vm579, %v558
  %599 = vst [vmem:[%s2 + $0xa0] sm:$0xff] %v366
  %600 = vst.msk [vmem:[%s2 + $0xa8] sm:$0xff] %vm579, %v561
  %601 = vst [vmem:[%s2 + $0xb0] sm:$0xff] %v369
  %602 = vst.msk [vmem:[%s2 + $0xb8] sm:$0xff] %vm579, %v564
  %603 = vst [vmem:[%s2 + $0xc0] sm:$0xff] %v372
  %604 = vst.msk [vmem:[%s2 + $0xc8] sm:$0xff] %vm579, %v567
  %605 = vst [vmem:[%s2 + $0xd0] sm:$0xff] %v375
  %606 = vst.msk [vmem:[%s2 + $0xd8] sm:$0xff] %vm579, %v570
  %607 = vst [vmem:[%s2 + $0xe0] sm:$0xff] %v378
  %608 = vst.msk [vmem:[%s2 + $0xe8] sm:$0xff] %vm579, %v573
  %609 = vst [vmem:[%s2 + $0xf0] sm:$0xff] %v381
  %610 = vst.msk [vmem:[%s2 + $0xf8] sm:$0xff] %vm579, %v576
  // Predicated region
  $region10: #{conv2d_1x1.1} parent=0 // pred_check
    _
  $region11: #{conv2d_1x1.1} parent=0 // pred_check_branch
    %612 = sbr.rel (0) target = $region13
  $region12: #{conv2d_1x1.1} parent=0 // pred_region
    _
  $region13: #{conv2d_1x1.1} parent=0 // pred_fallthru
    _
  // Predicated region
  $region14: #{conv2d_1x1.1} parent=0 // pred_check
    _
  $region15: #{conv2d_1x1.1} parent=0 // pred_check_branch
    %614 = sbr.rel (0) target = $region17
  $region16: #{conv2d_1x1.1} parent=0 // pred_region
    _
  $region17: #{conv2d_1x1.1} parent=0 // pred_fallthru
    _

</llo_original>
